<compile_context>
chip_gen: v5e
topology: v5e:2x2
jax: 0.10.0
libtpu: 0.0.40
codegen_flags: <defaults>
</compile_context>

<pallas_src>
import functools

import jax
import jax.numpy as jnp
from jax.experimental import pallas as pl
from jax.experimental.pallas import tpu as pltpu


def double_conv_kernel(x_ref, w1_ref, b1_ref, w2_ref, b2_ref, o_ref, *,
                       row_stride, ksize):
    """Fused valid 3x3 conv -> ReLU -> valid 3x3 conv -> ReLU.

    Layouts (all VMEM):
      x_ref : (N, Cin, L0)      channels on sublanes, row-major flattened
                                spatial (row stride = row_stride) on lanes,
                                zero-padded to L0 columns.
      w1_ref: (9*Cout, Cin)     tap-major: row (kh*3+kw)*Cout + co.
      b1_ref: (Cout, 1)
      w2_ref: (9*Cout, Cout)
      b2_ref: (Cout, 1)
      o_ref : (N, Cout, L2)     conv2 output, full-width rows (columns beyond
                                Wo2 are scrap, dropped by the wrapper).

    Trick: y[co, p] = relu(b[co] + sum_t (W_t @ a)[co, p + off_t]) where
    off_t = kh*row_stride + kw.  All 9 channel-mixes W_t @ a are a single MXU
    matmul (w_all @ a); the stencil is 9 shifted VPU adds.
    """
    n_batch, _, _ = x_ref.shape
    c_out = b1_ref.shape[0]
    l_out2 = o_ref.shape[2]
    off_max = (ksize - 1) * row_stride + (ksize - 1)
    l_out1 = l_out2 + off_max          # conv1 intermediate width (VMEM only)

    w1 = w1_ref[...]
    b1 = b1_ref[...]
    w2 = w2_ref[...]
    b2 = b2_ref[...]

    def conv3x3_relu(a_in, w_all, b, l_out):
        # One matmul mixes channels for all 9 taps at once -> (9*Cout, L_in).
        z = jnp.dot(w_all, a_in, preferred_element_type=jnp.float32)
        acc = jnp.zeros((c_out, l_out), jnp.float32)
        for kh in range(ksize):                      # static 3x3 stencil
            for kw in range(ksize):
                t = kh * ksize + kw
                off = kh * row_stride + kw
                acc = acc + z[t * c_out:(t + 1) * c_out, off:off + l_out]
        return jnp.maximum(acc + b, 0.0)             # bias + ReLU fused

    for n in range(n_batch):                         # static tiny batch loop
        x = x_ref[n]                                 # (Cin, L0)
        y1 = conv3x3_relu(x, w1, b1, l_out1)         # conv1+ReLU, stays in VMEM
        y2 = conv3x3_relu(y1, w2, b2, l_out2)        # conv2+ReLU
        o_ref[n] = y2.astype(o_ref.dtype)            # lane-dense, NCHW row order


def prepare_double_conv_params(params):
    """One-time conversion of PyTorch OIHW params to the kernel layout."""
    def to_tap_major(w):                 # (Cout, Cin, 3, 3) -> (9*Cout, Cin)
        co, ci, kh, kw = w.shape
        return jnp.transpose(w, (2, 3, 0, 1)).reshape(kh * kw * co, ci)
    return dict(
        w1=to_tap_major(params["w1"]), b1=params["b1"].reshape(-1, 1),
        w2=to_tap_major(params["w2"]), b2=params["b2"].reshape(-1, 1),
    )


@jax.jit
def double_conv_forward(x_nchw, kparams):
    """DoubleConv.forward: NCHW in, NCHW out (matches the PyTorch module)."""
    N, Cin, H, W = x_nchw.shape
    Cout = kparams["b1"].shape[0]
    ksize = 3
    Ho2, Wo2 = H - 2 * (ksize - 1), W - 2 * (ksize - 1)
    off_max = (ksize - 1) * (W + 1)      # max stencil shift in flat indexing
    L2 = Ho2 * W                          # conv2 rows at full width
    L1 = L2 + off_max                     # conv1 intermediate width
    L0 = max(H * W, L1 + off_max)         # padded flattened input width

    # Wrapper-side (free) layout plumbing: flatten spatial onto the lane axis
    # and zero-pad a few trailing columns so all in-kernel slices are in-bounds.
    x_flat = x_nchw.reshape(N, Cin, H * W)
    if L0 > H * W:
        x_flat = jnp.pad(x_flat, ((0, 0), (0, 0), (0, L0 - H * W)))

    vmem = pltpu.MemorySpace.VMEM
    out_ext = pl.pallas_call(
        functools.partial(double_conv_kernel, row_stride=W, ksize=ksize),
        out_shape=jax.ShapeDtypeStruct((N, Cout, L2), x_nchw.dtype),
        in_specs=[pl.BlockSpec(memory_space=vmem)] * 5,
        out_specs=pl.BlockSpec(memory_space=vmem),
    )(x_flat, kparams["w1"], kparams["b1"], kparams["w2"], kparams["b2"])

    # Rows are already NCHW order; just drop the scrap columns beyond Wo2.
    return out_ext.reshape(N, Cout, Ho2, W)[:, :, :, :Wo2]


def init_double_conv_params(key, in_ch, out_ch, dtype=jnp.float32):
    """Deterministic synthetic params with nn.Conv2d shapes (OIHW weights)."""
    k1, k2, k3, k4 = jax.random.split(key, 4)
    scale1 = 1.0 / jnp.sqrt(in_ch * 9.0)
    scale2 = 1.0 / jnp.sqrt(out_ch * 9.0)
    w1 = jax.random.uniform(k1, (out_ch, in_ch, 3, 3), dtype, -scale1, scale1)
    b1 = jax.random.uniform(k2, (out_ch,), dtype, -scale1, scale1)
    w2 = jax.random.uniform(k3, (out_ch, out_ch, 3, 3), dtype, -scale2, scale2)
    b2 = jax.random.uniform(k4, (out_ch,), dtype, -scale2, scale2)
    return dict(w1=w1, b1=b1, w2=w2, b2=b2)


def _reference_forward(x_nchw, params):
    """Pure-JAX reference (lax conv) used only for a correctness check."""
    def conv(x, w, b):
        y = jax.lax.conv_general_dilated(
            x, w, window_strides=(1, 1), padding="VALID",
            dimension_numbers=("NCHW", "OIHW", "NCHW"),
        )
        return jnp.maximum(y + b[None, :, None, None], 0.0)

    y = conv(x_nchw, params["w1"], params["b1"])
    y = conv(y, params["w2"], params["b2"])
    return y


if __name__ == "__main__":
    key = jax.random.PRNGKey(0)
    k_x, k_p = jax.random.split(key)

    N, C_in, C_out, S = 2, 4, 8, 16
    x = jax.random.normal(k_x, (N, C_in, S, S), jnp.float32)
    params = init_double_conv_params(k_p, C_in, C_out)
    kparams = prepare_double_conv_params(params)   # one-time weight re-layout

    out = double_conv_forward(x, kparams)
    out = jax.block_until_ready(out)

    assert out.shape == (N, C_out, S - 4, S - 4), out.shape

    ref = _reference_forward(x, params)
    assert jnp.allclose(out, ref, atol=1e-4, rtol=1e-4), (
        float(jnp.max(jnp.abs(out - ref)))
    )

    print("KERNEL_OK")
</pallas_src>

<mosaic_0001>
module attributes {stable_mosaic.version = 11 : i64} {
  func.func @double_conv_kernel(%arg0: memref<2x4x260xf32, #tpu.memory_space<vmem>>, %arg1: memref<72x4xf32, #tpu.memory_space<vmem>>, %arg2: memref<8x1xf32, #tpu.memory_space<vmem>>, %arg3: memref<72x8xf32, #tpu.memory_space<vmem>>, %arg4: memref<8x1xf32, #tpu.memory_space<vmem>>, %arg5: memref<2x8x192xf32, #tpu.memory_space<vmem>>) attributes {dimension_semantics = [], scalar_prefetch = 0 : i64, scratch_operands = 0 : i64, tpu.core_type = #tpu.core_type<tc>} {
    %c0 = arith.constant 0 : index
    %c0_0 = arith.constant 0 : index
    %0 = vector.load %arg1[%c0, %c0_0] : memref<72x4xf32, #tpu.memory_space<vmem>>, vector<72x4xf32>
    %c0_1 = arith.constant 0 : index
    %c0_2 = arith.constant 0 : index
    %1 = vector.load %arg2[%c0_1, %c0_2] : memref<8x1xf32, #tpu.memory_space<vmem>>, vector<8x1xf32>
    %c0_3 = arith.constant 0 : index
    %c0_4 = arith.constant 0 : index
    %2 = vector.load %arg3[%c0_3, %c0_4] : memref<72x8xf32, #tpu.memory_space<vmem>>, vector<72x8xf32>
    %c0_5 = arith.constant 0 : index
    %c0_6 = arith.constant 0 : index
    %3 = vector.load %arg4[%c0_5, %c0_6] : memref<8x1xf32, #tpu.memory_space<vmem>>, vector<8x1xf32>
    %c0_7 = arith.constant 0 : index
    %c0_8 = arith.constant 0 : index
    %c0_9 = arith.constant 0 : index
    %4 = vector.load %arg0[%c0_7, %c0_8, %c0_9] : memref<2x4x260xf32, #tpu.memory_space<vmem>>, vector<1x4x260xf32>
    %5 = vector.shape_cast %4 : vector<1x4x260xf32> to vector<4x260xf32>
    %cst = arith.constant dense<0.000000e+00> : vector<72x260xf32>
    %6 = tpu.matmul %0, %5, %cst {dimension_numbers = #tpu.dot_dimension_numbers<[1], [0], [0], [1], [0, 0, 1, 1], [], []>} : vector<72x4xf32>, vector<4x260xf32>, vector<72x260xf32> -> vector<72x260xf32>
    %cst_10 = arith.constant 0.000000e+00 : f32
    %7 = vector.broadcast %cst_10 : f32 to vector<8x226xf32>
    %8 = vector.extract_strided_slice %6 {offsets = [0, 0], sizes = [8, 226], strides = [1, 1]} : vector<72x260xf32> to vector<8x226xf32>
    %9 = arith.addf %7, %8 : vector<8x226xf32>
    %10 = vector.extract_strided_slice %6 {offsets = [8, 1], sizes = [8, 226], strides = [1, 1]} : vector<72x260xf32> to vector<8x226xf32>
    %11 = arith.addf %9, %10 : vector<8x226xf32>
    %12 = vector.extract_strided_slice %6 {offsets = [16, 2], sizes = [8, 226], strides = [1, 1]} : vector<72x260xf32> to vector<8x226xf32>
    %13 = arith.addf %11, %12 : vector<8x226xf32>
    %14 = vector.extract_strided_slice %6 {offsets = [24, 16], sizes = [8, 226], strides = [1, 1]} : vector<72x260xf32> to vector<8x226xf32>
    %15 = arith.addf %13, %14 : vector<8x226xf32>
    %16 = vector.extract_strided_slice %6 {offsets = [32, 17], sizes = [8, 226], strides = [1, 1]} : vector<72x260xf32> to vector<8x226xf32>
    %17 = arith.addf %15, %16 : vector<8x226xf32>
    %18 = vector.extract_strided_slice %6 {offsets = [40, 18], sizes = [8, 226], strides = [1, 1]} : vector<72x260xf32> to vector<8x226xf32>
    %19 = arith.addf %17, %18 : vector<8x226xf32>
    %20 = vector.extract_strided_slice %6 {offsets = [48, 32], sizes = [8, 226], strides = [1, 1]} : vector<72x260xf32> to vector<8x226xf32>
    %21 = arith.addf %19, %20 : vector<8x226xf32>
    %22 = vector.extract_strided_slice %6 {offsets = [56, 33], sizes = [8, 226], strides = [1, 1]} : vector<72x260xf32> to vector<8x226xf32>
    %23 = arith.addf %21, %22 : vector<8x226xf32>
    %24 = vector.extract_strided_slice %6 {offsets = [64, 34], sizes = [8, 226], strides = [1, 1]} : vector<72x260xf32> to vector<8x226xf32>
    %25 = arith.addf %23, %24 : vector<8x226xf32>
    %26 = vector.broadcast %1 : vector<8x1xf32> to vector<8x226xf32>
    %27 = arith.addf %25, %26 : vector<8x226xf32>
    %cst_11 = arith.constant 0.000000e+00 : f32
    %28 = vector.broadcast %cst_11 : f32 to vector<8x226xf32>
    %29 = arith.maximumf %27, %28 : vector<8x226xf32>
    %cst_12 = arith.constant dense<0.000000e+00> : vector<72x226xf32>
    %30 = tpu.matmul %2, %29, %cst_12 {dimension_numbers = #tpu.dot_dimension_numbers<[1], [0], [0], [1], [0, 0, 1, 1], [], []>} : vector<72x8xf32>, vector<8x226xf32>, vector<72x226xf32> -> vector<72x226xf32>
    %cst_13 = arith.constant 0.000000e+00 : f32
    %31 = vector.broadcast %cst_13 : f32 to vector<8x192xf32>
    %32 = vector.extract_strided_slice %30 {offsets = [0, 0], sizes = [8, 192], strides = [1, 1]} : vector<72x226xf32> to vector<8x192xf32>
    %33 = arith.addf %31, %32 : vector<8x192xf32>
    %34 = vector.extract_strided_slice %30 {offsets = [8, 1], sizes = [8, 192], strides = [1, 1]} : vector<72x226xf32> to vector<8x192xf32>
    %35 = arith.addf %33, %34 : vector<8x192xf32>
    %36 = vector.extract_strided_slice %30 {offsets = [16, 2], sizes = [8, 192], strides = [1, 1]} : vector<72x226xf32> to vector<8x192xf32>
    %37 = arith.addf %35, %36 : vector<8x192xf32>
    %38 = vector.extract_strided_slice %30 {offsets = [24, 16], sizes = [8, 192], strides = [1, 1]} : vector<72x226xf32> to vector<8x192xf32>
    %39 = arith.addf %37, %38 : vector<8x192xf32>
    %40 = vector.extract_strided_slice %30 {offsets = [32, 17], sizes = [8, 192], strides = [1, 1]} : vector<72x226xf32> to vector<8x192xf32>
    %41 = arith.addf %39, %40 : vector<8x192xf32>
    %42 = vector.extract_strided_slice %30 {offsets = [40, 18], sizes = [8, 192], strides = [1, 1]} : vector<72x226xf32> to vector<8x192xf32>
    %43 = arith.addf %41, %42 : vector<8x192xf32>
    %44 = vector.extract_strided_slice %30 {offsets = [48, 32], sizes = [8, 192], strides = [1, 1]} : vector<72x226xf32> to vector<8x192xf32>
    %45 = arith.addf %43, %44 : vector<8x192xf32>
    %46 = vector.extract_strided_slice %30 {offsets = [56, 33], sizes = [8, 192], strides = [1, 1]} : vector<72x226xf32> to vector<8x192xf32>
    %47 = arith.addf %45, %46 : vector<8x192xf32>
    %48 = vector.extract_strided_slice %30 {offsets = [64, 34], sizes = [8, 192], strides = [1, 1]} : vector<72x226xf32> to vector<8x192xf32>
    %49 = arith.addf %47, %48 : vector<8x192xf32>
    %50 = vector.broadcast %3 : vector<8x1xf32> to vector<8x192xf32>
    %51 = arith.addf %49, %50 : vector<8x192xf32>
    %cst_14 = arith.constant 0.000000e+00 : f32
    %52 = vector.broadcast %cst_14 : f32 to vector<8x192xf32>
    %53 = arith.maximumf %51, %52 : vector<8x192xf32>
    %c0_15 = arith.constant 0 : index
    %c0_16 = arith.constant 0 : index
    %c0_17 = arith.constant 0 : index
    %54 = vector.load %arg5[%c0_15, %c0_16, %c0_17] : memref<2x8x192xf32, #tpu.memory_space<vmem>>, vector<1x8x192xf32>
    %55 = vector.shape_cast %54 : vector<1x8x192xf32> to vector<8x192xf32>
    %56 = vector.shape_cast %53 : vector<8x192xf32> to vector<1x8x192xf32>
    tpu.vector_store %arg5[%c0_15, %c0_16, %c0_17], %56 {strides = array<i32>} : memref<2x8x192xf32, #tpu.memory_space<vmem>>, vector<1x8x192xf32>,
    %c1 = arith.constant 1 : index
    %c0_18 = arith.constant 0 : index
    %c0_19 = arith.constant 0 : index
    %57 = vector.load %arg0[%c1, %c0_18, %c0_19] : memref<2x4x260xf32, #tpu.memory_space<vmem>>, vector<1x4x260xf32>
    %58 = vector.shape_cast %57 : vector<1x4x260xf32> to vector<4x260xf32>
    %cst_20 = arith.constant dense<0.000000e+00> : vector<72x260xf32>
    %59 = tpu.matmul %0, %58, %cst_20 {dimension_numbers = #tpu.dot_dimension_numbers<[1], [0], [0], [1], [0, 0, 1, 1], [], []>} : vector<72x4xf32>, vector<4x260xf32>, vector<72x260xf32> -> vector<72x260xf32>
    %cst_21 = arith.constant 0.000000e+00 : f32
    %60 = vector.broadcast %cst_21 : f32 to vector<8x226xf32>
    %61 = vector.extract_strided_slice %59 {offsets = [0, 0], sizes = [8, 226], strides = [1, 1]} : vector<72x260xf32> to vector<8x226xf32>
    %62 = arith.addf %60, %61 : vector<8x226xf32>
    %63 = vector.extract_strided_slice %59 {offsets = [8, 1], sizes = [8, 226], strides = [1, 1]} : vector<72x260xf32> to vector<8x226xf32>
    %64 = arith.addf %62, %63 : vector<8x226xf32>
    %65 = vector.extract_strided_slice %59 {offsets = [16, 2], sizes = [8, 226], strides = [1, 1]} : vector<72x260xf32> to vector<8x226xf32>
    %66 = arith.addf %64, %65 : vector<8x226xf32>
    %67 = vector.extract_strided_slice %59 {offsets = [24, 16], sizes = [8, 226], strides = [1, 1]} : vector<72x260xf32> to vector<8x226xf32>
    %68 = arith.addf %66, %67 : vector<8x226xf32>
    %69 = vector.extract_strided_slice %59 {offsets = [32, 17], sizes = [8, 226], strides = [1, 1]} : vector<72x260xf32> to vector<8x226xf32>
    %70 = arith.addf %68, %69 : vector<8x226xf32>
    %71 = vector.extract_strided_slice %59 {offsets = [40, 18], sizes = [8, 226], strides = [1, 1]} : vector<72x260xf32> to vector<8x226xf32>
    %72 = arith.addf %70, %71 : vector<8x226xf32>
    %73 = vector.extract_strided_slice %59 {offsets = [48, 32], sizes = [8, 226], strides = [1, 1]} : vector<72x260xf32> to vector<8x226xf32>
    %74 = arith.addf %72, %73 : vector<8x226xf32>
    %75 = vector.extract_strided_slice %59 {offsets = [56, 33], sizes = [8, 226], strides = [1, 1]} : vector<72x260xf32> to vector<8x226xf32>
    %76 = arith.addf %74, %75 : vector<8x226xf32>
    %77 = vector.extract_strided_slice %59 {offsets = [64, 34], sizes = [8, 226], strides = [1, 1]} : vector<72x260xf32> to vector<8x226xf32>
    %78 = arith.addf %76, %77 : vector<8x226xf32>
    %79 = vector.broadcast %1 : vector<8x1xf32> to vector<8x226xf32>
    %80 = arith.addf %78, %79 : vector<8x226xf32>
    %cst_22 = arith.constant 0.000000e+00 : f32
    %81 = vector.broadcast %cst_22 : f32 to vector<8x226xf32>
    %82 = arith.maximumf %80, %81 : vector<8x226xf32>
    %cst_23 = arith.constant dense<0.000000e+00> : vector<72x226xf32>
    %83 = tpu.matmul %2, %82, %cst_23 {dimension_numbers = #tpu.dot_dimension_numbers<[1], [0], [0], [1], [0, 0, 1, 1], [], []>} : vector<72x8xf32>, vector<8x226xf32>, vector<72x226xf32> -> vector<72x226xf32>
    %cst_24 = arith.constant 0.000000e+00 : f32
    %84 = vector.broadcast %cst_24 : f32 to vector<8x192xf32>
    %85 = vector.extract_strided_slice %83 {offsets = [0, 0], sizes = [8, 192], strides = [1, 1]} : vector<72x226xf32> to vector<8x192xf32>
    %86 = arith.addf %84, %85 : vector<8x192xf32>
    %87 = vector.extract_strided_slice %83 {offsets = [8, 1], sizes = [8, 192], strides = [1, 1]} : vector<72x226xf32> to vector<8x192xf32>
    %88 = arith.addf %86, %87 : vector<8x192xf32>
    %89 = vector.extract_strided_slice %83 {offsets = [16, 2], sizes = [8, 192], strides = [1, 1]} : vector<72x226xf32> to vector<8x192xf32>
    %90 = arith.addf %88, %89 : vector<8x192xf32>
    %91 = vector.extract_strided_slice %83 {offsets = [24, 16], sizes = [8, 192], strides = [1, 1]} : vector<72x226xf32> to vector<8x192xf32>
    %92 = arith.addf %90, %91 : vector<8x192xf32>
    %93 = vector.extract_strided_slice %83 {offsets = [32, 17], sizes = [8, 192], strides = [1, 1]} : vector<72x226xf32> to vector<8x192xf32>
    %94 = arith.addf %92, %93 : vector<8x192xf32>
    %95 = vector.extract_strided_slice %83 {offsets = [40, 18], sizes = [8, 192], strides = [1, 1]} : vector<72x226xf32> to vector<8x192xf32>
    %96 = arith.addf %94, %95 : vector<8x192xf32>
    %97 = vector.extract_strided_slice %83 {offsets = [48, 32], sizes = [8, 192], strides = [1, 1]} : vector<72x226xf32> to vector<8x192xf32>
    %98 = arith.addf %96, %97 : vector<8x192xf32>
    %99 = vector.extract_strided_slice %83 {offsets = [56, 33], sizes = [8, 192], strides = [1, 1]} : vector<72x226xf32> to vector<8x192xf32>
    %100 = arith.addf %98, %99 : vector<8x192xf32>
    %101 = vector.extract_strided_slice %83 {offsets = [64, 34], sizes = [8, 192], strides = [1, 1]} : vector<72x226xf32> to vector<8x192xf32>
    %102 = arith.addf %100, %101 : vector<8x192xf32>
    %103 = vector.broadcast %3 : vector<8x1xf32> to vector<8x192xf32>
    %104 = arith.addf %102, %103 : vector<8x192xf32>
    %cst_25 = arith.constant 0.000000e+00 : f32
    %105 = vector.broadcast %cst_25 : f32 to vector<8x192xf32>
    %106 = arith.maximumf %104, %105 : vector<8x192xf32>
    %c1_26 = arith.constant 1 : index
    %c0_27 = arith.constant 0 : index
    %c0_28 = arith.constant 0 : index
    %107 = vector.load %arg5[%c1_26, %c0_27, %c0_28] : memref<2x8x192xf32, #tpu.memory_space<vmem>>, vector<1x8x192xf32>
    %108 = vector.shape_cast %107 : vector<1x8x192xf32> to vector<8x192xf32>
    %109 = vector.shape_cast %106 : vector<8x192xf32> to vector<1x8x192xf32>
    tpu.vector_store %arg5[%c1_26, %c0_27, %c0_28], %109 {strides = array<i32>} : memref<2x8x192xf32, #tpu.memory_space<vmem>>, vector<1x8x192xf32>,
    return
  }
}

</mosaic_0001>

<llo_original>
// kernel: double_conv_forward.1
$region0: #{double_conv_forward.1}
  #allocation0 [shape = 'u32[]', space=smem, size = 0x4, offset = 0x4, fixed_abs, tag = 'smem constant byte address 0x4 - core index']
  #allocation1 [shape = 'u32[72,128]{1,0:T(1,128)}', space=vmem, size = 0x9000, scoped, tag = 'internal scratch']
  %s0 = inlined_call_operand.vmem [shape: f32[2,4,260], index: 0, kind: input, shape index: {}]
  %s1 = inlined_call_operand.vmem [shape: f32[72,4], index: 1, kind: input, shape index: {}]
  %s2 = inlined_call_operand.vmem [shape: f32[8,1], index: 2, kind: input, shape index: {}]
  %s3 = inlined_call_operand.vmem [shape: f32[72,8], index: 3, kind: input, shape index: {}]
  %s4 = inlined_call_operand.vmem [shape: f32[8,1], index: 4, kind: input, shape index: {}]
  %s5 = inlined_call_operand.vmem [shape: f32[2,8,192], index: 5, kind: output, shape index: {}]
  %s6 = sld [smem:[#allocation0]]
  $region30: #{double_conv_forward.1} parent=0
    _
  %s8 = ssub.s32 1, %s6
  %s9 = scalar_select 0, %s8, %s6
  // Predicated region
  $region2: #{double_conv_forward.1} parent=0 // pred_check
    _
  $region3: #{double_conv_forward.1} parent=0 // pred_check_branch
    %11 = sbr.rel (0) target = $region5
  $region4: #{double_conv_forward.1} parent=0 // pred_region
    _
  $region5: #{double_conv_forward.1} parent=0 // pred_fallthru
    _
  // Predicated region
  $region6: #{double_conv_forward.1} parent=0 // pred_check
    _
  $region7: #{double_conv_forward.1} parent=0 // pred_check_branch
    %13 = sbr.rel (0) target = $region9
  $region8: #{double_conv_forward.1} parent=0 // pred_region
    _
  $region9: #{double_conv_forward.1} parent=0 // pred_fallthru
    _
  // Predicated region
  $region10: #{double_conv_forward.1} parent=0 // pred_check
    _
  $region11: #{double_conv_forward.1} parent=0 // pred_check_branch
    %15 = sbr.rel (0) target = $region13
  $region12: #{double_conv_forward.1} parent=0 // pred_region
    _
  $region13: #{double_conv_forward.1} parent=0 // pred_fallthru
    _
  // Predicated region
  $region14: #{double_conv_forward.1} parent=0 // pred_check
    _
  $region15: #{double_conv_forward.1} parent=0 // pred_check_branch
    %17 = sbr.rel (0) target = $region17
  $region16: #{double_conv_forward.1} parent=0 // pred_region
    _
  $region17: #{double_conv_forward.1} parent=0 // pred_fallthru
    _
  // Predicated region
  $region18: #{double_conv_forward.1} parent=0 // pred_check
    _
  $region19: #{double_conv_forward.1} parent=0 // pred_check_branch
    %19 = sbr.rel (0) target = $region21
  $region20: #{double_conv_forward.1} parent=0 // pred_region
    _
  $region21: #{double_conv_forward.1} parent=0 // pred_fallthru
    _
  %v20 = vld [vmem:[%s1] sm:$0xff]
  %v21 = vld [vmem:[%s1 + $0x8] sm:$0xff]
  %v22 = vld [vmem:[%s1 + $0x10] sm:$0xff]
  %v23 = vld [vmem:[%s1 + $0x18] sm:$0xff]
  %v24 = vld [vmem:[%s1 + $0x20] sm:$0xff]
  %v25 = vld [vmem:[%s1 + $0x28] sm:$0xff]
  %v26 = vld [vmem:[%s1 + $0x30] sm:$0xff]
  %v27 = vld [vmem:[%s1 + $0x38] sm:$0xff]
  %v28 = vld [vmem:[%s1 + $0x40] sm:$0xff]
  %v29 = vld [vmem:[%s2] sm:$0xff]
  %v30 = vld [vmem:[%s3] sm:$0xff]
  %v31 = vld [vmem:[%s3 + $0x8] sm:$0xff]
  %v32 = vld [vmem:[%s3 + $0x10] sm:$0xff]
  %v33 = vld [vmem:[%s3 + $0x18] sm:$0xff]
  %v34 = vld [vmem:[%s3 + $0x20] sm:$0xff]
  %v35 = vld [vmem:[%s3 + $0x28] sm:$0xff]
  %v36 = vld [vmem:[%s3 + $0x30] sm:$0xff]
  %v37 = vld [vmem:[%s3 + $0x38] sm:$0xff]
  %v38 = vld [vmem:[%s3 + $0x40] sm:$0xff]
  %v39 = vld [vmem:[%s4] sm:$0xff]
  %v40 = vld [vmem:[%s0] sm:$0xff]
  %v41 = vld [vmem:[%s0 + $0x8] sm:$0xf]
  %44 = vst [vmem:[#allocation1] ss:$2 sm:$0xff] %v40
  %s45 = scalar_lea.vmem [#allocation1], 16
  %46 = vst [vmem:[%s45] ss:$2 sm:$0xff] %v41
  %v47 = vld.sshfl [vmem:[#allocation1] sm:$0xff pattern:$0x75316420]
  %v48 = vld.sshfl [vmem:[#allocation1 + $0x8] sm:$0xff pattern:$0x75316420]
  %v49 = vld.sshfl [vmem:[#allocation1 + $0x10] sm:$0xff pattern:$0x75316420]
  %vm50 = vcmask 31744
  %v52 = vsel %vm50, %v20, 0
  %v55 = vsel %vm50, %v21, 0
  %v58 = vsel %vm50, %v22, 0
  %v61 = vsel %vm50, %v23, 0
  %v64 = vsel %vm50, %v24, 0
  %v67 = vsel %vm50, %v25, 0
  %v70 = vsel %vm50, %v26, 0
  %v73 = vsel %vm50, %v27, 0
  %v76 = vsel %vm50, %v28, 0
  %vm78 = vcmask 1043456
  %v79 = vsel %vm78, %v47, 0
  %v81 = vsel %vm78, %v48, 0
  %v83 = vsel %vm78, %v49, 0
  %85 = vmatpush.msra.mxu0 0.0
  %86 = vmatpush.msra.mxu0 0.0
  %87 = vmatpush.msra.mxu0 0.0
  %88 = vmatpush.msra.mxu0 0.0
  %89 = vmatpush.msra.mxu0 0.0
  %90 = vmatpush.msra.mxu0 0.0
  %91 = vmatpush.msra.mxu0 0.0
  %92 = vmatpush.msra.mxu0 0.0
  %93 = vmatpush.msra.mxu0 0.0
  %94 = vmatpush.msra.mxu0 0.0
  %95 = vmatpush.msra.mxu0 0.0
  %96 = vmatpush.msra.mxu0 0.0
  %97 = vmatpush.msra.mxu0 0.0
  %98 = vmatpush.msra.mxu0 0.0
  %99 = vmatpush.msra.mxu0 0.0
  %100 = vmatpush.msra.mxu0 %v79
  %101 = vmatmul.f32.gmra.mxu0 %v52
  %v102 = vpop.f32.mrf.mxu0
  %v103 = vadd.f32 0.0, %v102
  %104 = vmatmul.f32.gmra.mxu0 %v55
  %v105 = vpop.f32.mrf.mxu0
  %v106 = vadd.f32 0.0, %v105
  %107 = vmatmul.f32.gmra.mxu0 %v58
  %v108 = vpop.f32.mrf.mxu0
  %v109 = vadd.f32 0.0, %v108
  %110 = vmatmul.f32.gmra.mxu0 %v61
  %v111 = vpop.f32.mrf.mxu0
  %v112 = vadd.f32 0.0, %v111
  %113 = vmatmul.f32.gmra.mxu0 %v64
  %v114 = vpop.f32.mrf.mxu0
  %v115 = vadd.f32 0.0, %v114
  %116 = vmatmul.f32.gmra.mxu0 %v67
  %v117 = vpop.f32.mrf.mxu0
  %v118 = vadd.f32 0.0, %v117
  %119 = vmatmul.f32.gmra.mxu0 %v70
  %v120 = vpop.f32.mrf.mxu0
  %v121 = vadd.f32 0.0, %v120
  %122 = vmatmul.f32.gmra.mxu0 %v73
  %v123 = vpop.f32.mrf.mxu0
  %v124 = vadd.f32 0.0, %v123
  %125 = vmatmul.f32.gmra.mxu0 %v76
  %v126 = vpop.f32.mrf.mxu0
  %v127 = vadd.f32 0.0, %v126
  %128 = vdwg.mxu0
  %129 = vmatpush.msra.mxu0 0.0
  %130 = vmatpush.msra.mxu0 0.0
  %131 = vmatpush.msra.mxu0 0.0
  %132 = vmatpush.msra.mxu0 0.0
  %133 = vmatpush.msra.mxu0 0.0
  %134 = vmatpush.msra.mxu0 0.0
  %135 = vmatpush.msra.mxu0 0.0
  %136 = vmatpush.msra.mxu0 0.0
  %137 = vmatpush.msra.mxu0 0.0
  %138 = vmatpush.msra.mxu0 0.0
  %139 = vmatpush.msra.mxu0 0.0
  %140 = vmatpush.msra.mxu0 0.0
  %141 = vmatpush.msra.mxu0 0.0
  %142 = vmatpush.msra.mxu0 0.0
  %143 = vmatpush.msra.mxu0 0.0
  %144 = vmatpush.msra.mxu0 %v81
  %145 = vmatmul.f32.gmra.mxu0 %v52
  %v146 = vpop.f32.mrf.mxu0
  %v147 = vadd.f32 0.0, %v146
  %148 = vmatmul.f32.gmra.mxu0 %v55
  %v149 = vpop.f32.mrf.mxu0
  %v150 = vadd.f32 0.0, %v149
  %151 = vmatmul.f32.gmra.mxu0 %v58
  %v152 = vpop.f32.mrf.mxu0
  %v153 = vadd.f32 0.0, %v152
  %154 = vmatmul.f32.gmra.mxu0 %v61
  %v155 = vpop.f32.mrf.mxu0
  %v156 = vadd.f32 0.0, %v155
  %157 = vmatmul.f32.gmra.mxu0 %v64
  %v158 = vpop.f32.mrf.mxu0
  %v159 = vadd.f32 0.0, %v158
  %160 = vmatmul.f32.gmra.mxu0 %v67
  %v161 = vpop.f32.mrf.mxu0
  %v162 = vadd.f32 0.0, %v161
  %163 = vmatmul.f32.gmra.mxu0 %v70
  %v164 = vpop.f32.mrf.mxu0
  %v165 = vadd.f32 0.0, %v164
  %166 = vmatmul.f32.gmra.mxu0 %v73
  %v167 = vpop.f32.mrf.mxu0
  %v168 = vadd.f32 0.0, %v167
  %169 = vmatmul.f32.gmra.mxu0 %v76
  %v170 = vpop.f32.mrf.mxu0
  %v171 = vadd.f32 0.0, %v170
  %172 = vdwg.mxu0
  %173 = vmatpush.msra.mxu0 0.0
  %174 = vmatpush.msra.mxu0 0.0
  %175 = vmatpush.msra.mxu0 0.0
  %176 = vmatpush.msra.mxu0 0.0
  %177 = vmatpush.msra.mxu0 0.0
  %178 = vmatpush.msra.mxu0 0.0
  %179 = vmatpush.msra.mxu0 0.0
  %180 = vmatpush.msra.mxu0 0.0
  %181 = vmatpush.msra.mxu0 0.0
  %182 = vmatpush.msra.mxu0 0.0
  %183 = vmatpush.msra.mxu0 0.0
  %184 = vmatpush.msra.mxu0 0.0
  %185 = vmatpush.msra.mxu0 0.0
  %186 = vmatpush.msra.mxu0 0.0
  %187 = vmatpush.msra.mxu0 0.0
  %188 = vmatpush.msra.mxu0 %v83
  %189 = vmatmul.f32.gmra.mxu0 %v52
  %v190 = vpop.f32.mrf.mxu0
  %191 = vmatmul.f32.gmra.mxu0 %v55
  %v192 = vpop.f32.mrf.mxu0
  %193 = vmatmul.f32.gmra.mxu0 %v58
  %v194 = vpop.f32.mrf.mxu0
  %195 = vmatmul.f32.gmra.mxu0 %v61
  %v196 = vpop.f32.mrf.mxu0
  %197 = vmatmul.f32.gmra.mxu0 %v64
  %v198 = vpop.f32.mrf.mxu0
  %199 = vmatmul.f32.gmra.mxu0 %v67
  %v200 = vpop.f32.mrf.mxu0
  %201 = vmatmul.f32.gmra.mxu0 %v70
  %v202 = vpop.f32.mrf.mxu0
  %v203 = vadd.f32 0.0, %v202
  %204 = vmatmul.f32.gmra.mxu0 %v73
  %v205 = vpop.f32.mrf.mxu0
  %v206 = vadd.f32 0.0, %v205
  %207 = vmatmul.f32.gmra.mxu0 %v76
  %v208 = vpop.f32.mrf.mxu0
  %v209 = vadd.f32 0.0, %v208
  %210 = vdwg.mxu0
  %v211 = vadd.f32 %v103, 0.0
  %v212 = vadd.f32 %v147, 0.0
  %215 = vrot.lane.b32.xlu0 %v106, 127
  %v216 = vpop.permute.xlu0 %215
  %217 = vrot.lane.b32.xlu0 %v150, 127
  %v218 = vpop.permute.xlu0 %217
  %vm219 = vcmask 1039360
  %v220 = vsel %vm219, %v216, %v218
  %v223 = vadd.f32 %v211, %v220
  %v224 = vadd.f32 %v212, %v218
  %227 = vrot.lane.b32.xlu0 %v109, 126
  %v228 = vpop.permute.xlu0 %227
  %229 = vrot.lane.b32.xlu0 %v153, 126
  %v230 = vpop.permute.xlu0 %229
  %vm231 = vcmask 1031168
  %v232 = vsel %vm231, %v228, %v230
  %v235 = vadd.f32 %v223, %v232
  %v236 = vadd.f32 %v224, %v230
  %239 = vrot.lane.b32.xlu0 %v112, 112
  %v240 = vpop.permute.xlu0 %239
  %241 = vrot.lane.b32.xlu0 %v156, 112
  %v242 = vpop.permute.xlu0 %241
  %vm243 = vcmask 916480
  %v244 = vsel %vm243, %v240, %v242
  %v247 = vadd.f32 %v235, %v244
  %v248 = vadd.f32 %v236, %v242
  %251 = vrot.lane.b32.xlu0 %v115, 111
  %v252 = vpop.permute.xlu0 %251
  %253 = vrot.lane.b32.xlu0 %v159, 111
  %v254 = vpop.permute.xlu0 %253
  %vm255 = vcmask 908288
  %v256 = vsel %vm255, %v252, %v254
  %v259 = vadd.f32 %v247, %v256
  %v260 = vadd.f32 %v248, %v254
  %263 = vrot.lane.b32.xlu0 %v118, 110
  %v264 = vpop.permute.xlu0 %263
  %265 = vrot.lane.b32.xlu0 %v162, 110
  %v266 = vpop.permute.xlu0 %265
  %vm267 = vcmask 900096
  %v268 = vsel %vm267, %v264, %v266
  %v271 = vadd.f32 %v259, %v268
  %v272 = vadd.f32 %v260, %v266
  %276 = vrot.lane.b32.xlu0 %v121, 96
  %v277 = vpop.permute.xlu0 %276
  %278 = vrot.lane.b32.xlu0 %v165, 96
  %v279 = vpop.permute.xlu0 %278
  %280 = vrot.lane.b32.xlu0 %v203, 96
  %v281 = vpop.permute.xlu0 %280
  %vm282 = vcmask 785408
  %v283 = vsel %vm282, %v277, %v279
  %v284 = vsel %vm282, %v279, %v281
  %v287 = vadd.f32 %v271, %v283
  %v288 = vadd.f32 %v272, %v284
  %292 = vrot.lane.b32.xlu0 %v124, 95
  %v293 = vpop.permute.xlu0 %292
  %294 = vrot.lane.b32.xlu0 %v168, 95
  %v295 = vpop.permute.xlu0 %294
  %296 = vrot.lane.b32.xlu0 %v206, 95
  %v297 = vpop.permute.xlu0 %296
  %vm298 = vcmask 777216
  %v299 = vsel %vm298, %v293, %v295
  %v300 = vsel %vm298, %v295, %v297
  %v303 = vadd.f32 %v287, %v299
  %v304 = vadd.f32 %v288, %v300
  %308 = vrot.lane.b32.xlu0 %v127, 94
  %v309 = vpop.permute.xlu0 %308
  %310 = vrot.lane.b32.xlu0 %v171, 94
  %v311 = vpop.permute.xlu0 %310
  %312 = vrot.lane.b32.xlu0 %v209, 94
  %v313 = vpop.permute.xlu0 %312
  %vm314 = vcmask 769024
  %v315 = vsel %vm314, %v309, %v311
  %v316 = vsel %vm314, %v311, %v313
  %v319 = vadd.f32 %v303, %v315
  %v320 = vadd.f32 %v304, %v316
  %322 = vset.pattern.permute.xlu0 0
  %323 = vperm.xlu0 %322, %v29
  %v324 = vpop.permute.xlu0 %323
  %v326 = vadd.f32 %v319, %v324
  %v327 = vadd.f32 %v320, %v324
  %v328 = vmax.f32 %v326, 0.0
  %v329 = vmax.f32 %v327, 0.0
  %vm330 = vcmask 64512
  %v332 = vsel %vm330, %v30, 0
  %v335 = vsel %vm330, %v31, 0
  %v338 = vsel %vm330, %v32, 0
  %v341 = vsel %vm330, %v33, 0
  %v344 = vsel %vm330, %v34, 0
  %v347 = vsel %vm330, %v35, 0
  %v350 = vsel %vm330, %v36, 0
  %v353 = vsel %vm330, %v37, 0
  %v356 = vsel %vm330, %v38, 0
  %358 = vmatpush.msra.mxu0 0.0
  %359 = vmatpush.msra.mxu0 0.0
  %360 = vmatpush.msra.mxu0 0.0
  %361 = vmatpush.msra.mxu0 0.0
  %362 = vmatpush.msra.mxu0 0.0
  %363 = vmatpush.msra.mxu0 0.0
  %364 = vmatpush.msra.mxu0 0.0
  %365 = vmatpush.msra.mxu0 0.0
  %366 = vmatpush.msra.mxu0 0.0
  %367 = vmatpush.msra.mxu0 0.0
  %368 = vmatpush.msra.mxu0 0.0
  %369 = vmatpush.msra.mxu0 0.0
  %370 = vmatpush.msra.mxu0 0.0
  %371 = vmatpush.msra.mxu0 0.0
  %372 = vmatpush.msra.mxu0 0.0
  %373 = vmatpush.msra.mxu0 %v328
  %374 = vmatmul.f32.gmra.mxu0 %v332
  %v375 = vpop.f32.mrf.mxu0
  %v376 = vadd.f32 0.0, %v375
  %377 = vmatmul.f32.gmra.mxu0 %v335
  %v378 = vpop.f32.mrf.mxu0
  %v379 = vadd.f32 0.0, %v378
  %380 = vmatmul.f32.gmra.mxu0 %v338
  %v381 = vpop.f32.mrf.mxu0
  %v382 = vadd.f32 0.0, %v381
  %383 = vmatmul.f32.gmra.mxu0 %v341
  %v384 = vpop.f32.mrf.mxu0
  %v385 = vadd.f32 0.0, %v384
  %386 = vmatmul.f32.gmra.mxu0 %v344
  %v387 = vpop.f32.mrf.mxu0
  %v388 = vadd.f32 0.0, %v387
  %389 = vmatmul.f32.gmra.mxu0 %v347
  %v390 = vpop.f32.mrf.mxu0
  %v391 = vadd.f32 0.0, %v390
  %392 = vmatmul.f32.gmra.mxu0 %v350
  %v393 = vpop.f32.mrf.mxu0
  %v394 = vadd.f32 0.0, %v393
  %395 = vmatmul.f32.gmra.mxu0 %v353
  %v396 = vpop.f32.mrf.mxu0
  %v397 = vadd.f32 0.0, %v396
  %398 = vmatmul.f32.gmra.mxu0 %v356
  %v399 = vpop.f32.mrf.mxu0
  %v400 = vadd.f32 0.0, %v399
  %401 = vdwg.mxu0
  %402 = vmatpush.msra.mxu0 0.0
  %403 = vmatpush.msra.mxu0 0.0
  %404 = vmatpush.msra.mxu0 0.0
  %405 = vmatpush.msra.mxu0 0.0
  %406 = vmatpush.msra.mxu0 0.0
  %407 = vmatpush.msra.mxu0 0.0
  %408 = vmatpush.msra.mxu0 0.0
  %409 = vmatpush.msra.mxu0 0.0
  %410 = vmatpush.msra.mxu0 0.0
  %411 = vmatpush.msra.mxu0 0.0
  %412 = vmatpush.msra.mxu0 0.0
  %413 = vmatpush.msra.mxu0 0.0
  %414 = vmatpush.msra.mxu0 0.0
  %415 = vmatpush.msra.mxu0 0.0
  %416 = vmatpush.msra.mxu0 0.0
  %417 = vmatpush.msra.mxu0 %v329
  %418 = vmatmul.f32.gmra.mxu0 %v332
  %v419 = vpop.f32.mrf.mxu0
  %v420 = vadd.f32 0.0, %v419
  %421 = vmatmul.f32.gmra.mxu0 %v335
  %v422 = vpop.f32.mrf.mxu0
  %v423 = vadd.f32 0.0, %v422
  %424 = vmatmul.f32.gmra.mxu0 %v338
  %v425 = vpop.f32.mrf.mxu0
  %v426 = vadd.f32 0.0, %v425
  %427 = vmatmul.f32.gmra.mxu0 %v341
  %v428 = vpop.f32.mrf.mxu0
  %v429 = vadd.f32 0.0, %v428
  %430 = vmatmul.f32.gmra.mxu0 %v344
  %v431 = vpop.f32.mrf.mxu0
  %v432 = vadd.f32 0.0, %v431
  %433 = vmatmul.f32.gmra.mxu0 %v347
  %v434 = vpop.f32.mrf.mxu0
  %v435 = vadd.f32 0.0, %v434
  %436 = vmatmul.f32.gmra.mxu0 %v350
  %v437 = vpop.f32.mrf.mxu0
  %v438 = vadd.f32 0.0, %v437
  %439 = vmatmul.f32.gmra.mxu0 %v353
  %v440 = vpop.f32.mrf.mxu0
  %v441 = vadd.f32 0.0, %v440
  %442 = vmatmul.f32.gmra.mxu0 %v356
  %v443 = vpop.f32.mrf.mxu0
  %v444 = vadd.f32 0.0, %v443
  %445 = vdwg.mxu0
  %v446 = vadd.f32 %v376, 0.0
  %v447 = vadd.f32 %v420, 0.0
  %450 = vrot.lane.b32.xlu0 %v379, 127
  %v451 = vpop.permute.xlu0 %450
  %452 = vrot.lane.b32.xlu0 %v423, 127
  %v453 = vpop.permute.xlu0 %452
  %v454 = vsel %vm219, %v451, %v453
  %v457 = vadd.f32 %v446, %v454
  %v458 = vadd.f32 %v447, %v453
  %461 = vrot.lane.b32.xlu0 %v382, 126
  %v462 = vpop.permute.xlu0 %461
  %463 = vrot.lane.b32.xlu0 %v426, 126
  %v464 = vpop.permute.xlu0 %463
  %v465 = vsel %vm231, %v462, %v464
  %v468 = vadd.f32 %v457, %v465
  %v469 = vadd.f32 %v458, %v464
  %472 = vrot.lane.b32.xlu0 %v385, 112
  %v473 = vpop.permute.xlu0 %472
  %474 = vrot.lane.b32.xlu0 %v429, 112
  %v475 = vpop.permute.xlu0 %474
  %v476 = vsel %vm243, %v473, %v475
  %v479 = vadd.f32 %v468, %v476
  %v480 = vadd.f32 %v469, %v475
  %483 = vrot.lane.b32.xlu0 %v388, 111
  %v484 = vpop.permute.xlu0 %483
  %485 = vrot.lane.b32.xlu0 %v432, 111
  %v486 = vpop.permute.xlu0 %485
  %v487 = vsel %vm255, %v484, %v486
  %v490 = vadd.f32 %v479, %v487
  %v491 = vadd.f32 %v480, %v486
  %494 = vrot.lane.b32.xlu0 %v391, 110
  %v495 = vpop.permute.xlu0 %494
  %496 = vrot.lane.b32.xlu0 %v435, 110
  %v497 = vpop.permute.xlu0 %496
  %v498 = vsel %vm267, %v495, %v497
  %v501 = vadd.f32 %v490, %v498
  %v502 = vadd.f32 %v491, %v497
  %505 = vrot.lane.b32.xlu0 %v394, 96
  %v506 = vpop.permute.xlu0 %505
  %507 = vrot.lane.b32.xlu0 %v438, 96
  %v508 = vpop.permute.xlu0 %507
  %v509 = vsel %vm282, %v506, %v508
  %v512 = vadd.f32 %v501, %v509
  %v513 = vadd.f32 %v502, %v508
  %516 = vrot.lane.b32.xlu0 %v397, 95
  %v517 = vpop.permute.xlu0 %516
  %518 = vrot.lane.b32.xlu0 %v441, 95
  %v519 = vpop.permute.xlu0 %518
  %v520 = vsel %vm298, %v517, %v519
  %v523 = vadd.f32 %v512, %v520
  %v524 = vadd.f32 %v513, %v519
  %527 = vrot.lane.b32.xlu0 %v400, 94
  %v528 = vpop.permute.xlu0 %527
  %529 = vrot.lane.b32.xlu0 %v444, 94
  %v530 = vpop.permute.xlu0 %529
  %v531 = vsel %vm314, %v528, %v530
  %v534 = vadd.f32 %v523, %v531
  %v535 = vadd.f32 %v524, %v530
  %537 = vset.pattern.permute.xlu0 0
  %538 = vperm.xlu0 %537, %v39
  %v539 = vpop.permute.xlu0 %538
  %v541 = vadd.f32 %v534, %v539
  %v542 = vadd.f32 %v535, %v539
  %v543 = vmax.f32 %v541, 0.0
  %v544 = vmax.f32 %v542, 0.0
  %545 = vst [vmem:[%s5] sm:$0xff] %v543
  %vm546 = vcmask 523264
  %547 = vst.msk [vmem:[%s5 + $0x8] sm:$0xff] %vm546, %v544
  %s548 = scalar_lea.vmem %s0, 12
  %v549 = vld [vmem:[%s548] sm:$0xff]
  %v550 = vld [vmem:[%s548 + $0x8] sm:$0xf]
  %553 = vst [vmem:[#allocation1] ss:$2 sm:$0xff] %v549
  %s554 = scalar_lea.vmem [#allocation1], 16
  %555 = vst [vmem:[%s554] ss:$2 sm:$0xff] %v550
  %v556 = vld.sshfl [vmem:[#allocation1] sm:$0xff pattern:$0x75316420]
  %v557 = vld.sshfl [vmem:[#allocation1 + $0x8] sm:$0xff pattern:$0x75316420]
  %v558 = vld.sshfl [vmem:[#allocation1 + $0x10] sm:$0xff pattern:$0x75316420]
  %v559 = vsel %vm78, %v556, 0
  %v561 = vsel %vm78, %v557, 0
  %v563 = vsel %vm78, %v558, 0
  %565 = vmatpush.msra.mxu0 0.0
  %566 = vmatpush.msra.mxu0 0.0
  %567 = vmatpush.msra.mxu0 0.0
  %568 = vmatpush.msra.mxu0 0.0
  %569 = vmatpush.msra.mxu0 0.0
  %570 = vmatpush.msra.mxu0 0.0
  %571 = vmatpush.msra.mxu0 0.0
  %572 = vmatpush.msra.mxu0 0.0
  %573 = vmatpush.msra.mxu0 0.0
  %574 = vmatpush.msra.mxu0 0.0
  %575 = vmatpush.msra.mxu0 0.0
  %576 = vmatpush.msra.mxu0 0.0
  %577 = vmatpush.msra.mxu0 0.0
  %578 = vmatpush.msra.mxu0 0.0
  %579 = vmatpush.msra.mxu0 0.0
  %580 = vmatpush.msra.mxu0 %v559
  %581 = vmatmul.f32.gmra.mxu0 %v52
  %v582 = vpop.f32.mrf.mxu0
  %v583 = vadd.f32 0.0, %v582
  %584 = vmatmul.f32.gmra.mxu0 %v55
  %v585 = vpop.f32.mrf.mxu0
  %v586 = vadd.f32 0.0, %v585
  %587 = vmatmul.f32.gmra.mxu0 %v58
  %v588 = vpop.f32.mrf.mxu0
  %v589 = vadd.f32 0.0, %v588
  %590 = vmatmul.f32.gmra.mxu0 %v61
  %v591 = vpop.f32.mrf.mxu0
  %v592 = vadd.f32 0.0, %v591
  %593 = vmatmul.f32.gmra.mxu0 %v64
  %v594 = vpop.f32.mrf.mxu0
  %v595 = vadd.f32 0.0, %v594
  %596 = vmatmul.f32.gmra.mxu0 %v67
  %v597 = vpop.f32.mrf.mxu0
  %v598 = vadd.f32 0.0, %v597
  %599 = vmatmul.f32.gmra.mxu0 %v70
  %v600 = vpop.f32.mrf.mxu0
  %v601 = vadd.f32 0.0, %v600
  %602 = vmatmul.f32.gmra.mxu0 %v73
  %v603 = vpop.f32.mrf.mxu0
  %v604 = vadd.f32 0.0, %v603
  %605 = vmatmul.f32.gmra.mxu0 %v76
  %v606 = vpop.f32.mrf.mxu0
  %v607 = vadd.f32 0.0, %v606
  %608 = vdwg.mxu0
  %609 = vmatpush.msra.mxu0 0.0
  %610 = vmatpush.msra.mxu0 0.0
  %611 = vmatpush.msra.mxu0 0.0
  %612 = vmatpush.msra.mxu0 0.0
  %613 = vmatpush.msra.mxu0 0.0
  %614 = vmatpush.msra.mxu0 0.0
  %615 = vmatpush.msra.mxu0 0.0
  %616 = vmatpush.msra.mxu0 0.0
  %617 = vmatpush.msra.mxu0 0.0
  %618 = vmatpush.msra.mxu0 0.0
  %619 = vmatpush.msra.mxu0 0.0
  %620 = vmatpush.msra.mxu0 0.0
  %621 = vmatpush.msra.mxu0 0.0
  %622 = vmatpush.msra.mxu0 0.0
  %623 = vmatpush.msra.mxu0 0.0
  %624 = vmatpush.msra.mxu0 %v561
  %625 = vmatmul.f32.gmra.mxu0 %v52
  %v626 = vpop.f32.mrf.mxu0
  %v627 = vadd.f32 0.0, %v626
  %628 = vmatmul.f32.gmra.mxu0 %v55
  %v629 = vpop.f32.mrf.mxu0
  %v630 = vadd.f32 0.0, %v629
  %631 = vmatmul.f32.gmra.mxu0 %v58
  %v632 = vpop.f32.mrf.mxu0
  %v633 = vadd.f32 0.0, %v632
  %634 = vmatmul.f32.gmra.mxu0 %v61
  %v635 = vpop.f32.mrf.mxu0
  %v636 = vadd.f32 0.0, %v635
  %637 = vmatmul.f32.gmra.mxu0 %v64
  %v638 = vpop.f32.mrf.mxu0
  %v639 = vadd.f32 0.0, %v638
  %640 = vmatmul.f32.gmra.mxu0 %v67
  %v641 = vpop.f32.mrf.mxu0
  %v642 = vadd.f32 0.0, %v641
  %643 = vmatmul.f32.gmra.mxu0 %v70
  %v644 = vpop.f32.mrf.mxu0
  %v645 = vadd.f32 0.0, %v644
  %646 = vmatmul.f32.gmra.mxu0 %v73
  %v647 = vpop.f32.mrf.mxu0
  %v648 = vadd.f32 0.0, %v647
  %649 = vmatmul.f32.gmra.mxu0 %v76
  %v650 = vpop.f32.mrf.mxu0
  %v651 = vadd.f32 0.0, %v650
  %652 = vdwg.mxu0
  %653 = vmatpush.msra.mxu0 0.0
  %654 = vmatpush.msra.mxu0 0.0
  %655 = vmatpush.msra.mxu0 0.0
  %656 = vmatpush.msra.mxu0 0.0
  %657 = vmatpush.msra.mxu0 0.0
  %658 = vmatpush.msra.mxu0 0.0
  %659 = vmatpush.msra.mxu0 0.0
  %660 = vmatpush.msra.mxu0 0.0
  %661 = vmatpush.msra.mxu0 0.0
  %662 = vmatpush.msra.mxu0 0.0
  %663 = vmatpush.msra.mxu0 0.0
  %664 = vmatpush.msra.mxu0 0.0
  %665 = vmatpush.msra.mxu0 0.0
  %666 = vmatpush.msra.mxu0 0.0
  %667 = vmatpush.msra.mxu0 0.0
  %668 = vmatpush.msra.mxu0 %v563
  %669 = vmatmul.f32.gmra.mxu0 %v52
  %v670 = vpop.f32.mrf.mxu0
  %671 = vmatmul.f32.gmra.mxu0 %v55
  %v672 = vpop.f32.mrf.mxu0
  %673 = vmatmul.f32.gmra.mxu0 %v58
  %v674 = vpop.f32.mrf.mxu0
  %675 = vmatmul.f32.gmra.mxu0 %v61
  %v676 = vpop.f32.mrf.mxu0
  %677 = vmatmul.f32.gmra.mxu0 %v64
  %v678 = vpop.f32.mrf.mxu0
  %679 = vmatmul.f32.gmra.mxu0 %v67
  %v680 = vpop.f32.mrf.mxu0
  %681 = vmatmul.f32.gmra.mxu0 %v70
  %v682 = vpop.f32.mrf.mxu0
  %v683 = vadd.f32 0.0, %v682
  %684 = vmatmul.f32.gmra.mxu0 %v73
  %v685 = vpop.f32.mrf.mxu0
  %v686 = vadd.f32 0.0, %v685
  %687 = vmatmul.f32.gmra.mxu0 %v76
  %v688 = vpop.f32.mrf.mxu0
  %v689 = vadd.f32 0.0, %v688
  %690 = vdwg.mxu0
  %v691 = vadd.f32 %v583, 0.0
  %v692 = vadd.f32 %v627, 0.0
  %695 = vrot.lane.b32.xlu0 %v586, 127
  %v696 = vpop.permute.xlu0 %695
  %697 = vrot.lane.b32.xlu0 %v630, 127
  %v698 = vpop.permute.xlu0 %697
  %v699 = vsel %vm219, %v696, %v698
  %v702 = vadd.f32 %v691, %v699
  %v703 = vadd.f32 %v692, %v698
  %706 = vrot.lane.b32.xlu0 %v589, 126
  %v707 = vpop.permute.xlu0 %706
  %708 = vrot.lane.b32.xlu0 %v633, 126
  %v709 = vpop.permute.xlu0 %708
  %v710 = vsel %vm231, %v707, %v709
  %v713 = vadd.f32 %v702, %v710
  %v714 = vadd.f32 %v703, %v709
  %717 = vrot.lane.b32.xlu0 %v592, 112
  %v718 = vpop.permute.xlu0 %717
  %719 = vrot.lane.b32.xlu0 %v636, 112
  %v720 = vpop.permute.xlu0 %719
  %v721 = vsel %vm243, %v718, %v720
  %v724 = vadd.f32 %v713, %v721
  %v725 = vadd.f32 %v714, %v720
  %728 = vrot.lane.b32.xlu0 %v595, 111
  %v729 = vpop.permute.xlu0 %728
  %730 = vrot.lane.b32.xlu0 %v639, 111
  %v731 = vpop.permute.xlu0 %730
  %v732 = vsel %vm255, %v729, %v731
  %v735 = vadd.f32 %v724, %v732
  %v736 = vadd.f32 %v725, %v731
  %739 = vrot.lane.b32.xlu0 %v598, 110
  %v740 = vpop.permute.xlu0 %739
  %741 = vrot.lane.b32.xlu0 %v642, 110
  %v742 = vpop.permute.xlu0 %741
  %v743 = vsel %vm267, %v740, %v742
  %v746 = vadd.f32 %v735, %v743
  %v747 = vadd.f32 %v736, %v742
  %751 = vrot.lane.b32.xlu0 %v601, 96
  %v752 = vpop.permute.xlu0 %751
  %753 = vrot.lane.b32.xlu0 %v645, 96
  %v754 = vpop.permute.xlu0 %753
  %755 = vrot.lane.b32.xlu0 %v683, 96
  %v756 = vpop.permute.xlu0 %755
  %v757 = vsel %vm282, %v752, %v754
  %v758 = vsel %vm282, %v754, %v756
  %v761 = vadd.f32 %v746, %v757
  %v762 = vadd.f32 %v747, %v758
  %766 = vrot.lane.b32.xlu0 %v604, 95
  %v767 = vpop.permute.xlu0 %766
  %768 = vrot.lane.b32.xlu0 %v648, 95
  %v769 = vpop.permute.xlu0 %768
  %770 = vrot.lane.b32.xlu0 %v686, 95
  %v771 = vpop.permute.xlu0 %770
  %v772 = vsel %vm298, %v767, %v769
  %v773 = vsel %vm298, %v769, %v771
  %v776 = vadd.f32 %v761, %v772
  %v777 = vadd.f32 %v762, %v773
  %781 = vrot.lane.b32.xlu0 %v607, 94
  %v782 = vpop.permute.xlu0 %781
  %783 = vrot.lane.b32.xlu0 %v651, 94
  %v784 = vpop.permute.xlu0 %783
  %785 = vrot.lane.b32.xlu0 %v689, 94
  %v786 = vpop.permute.xlu0 %785
  %v787 = vsel %vm314, %v782, %v784
  %v788 = vsel %vm314, %v784, %v786
  %v791 = vadd.f32 %v776, %v787
  %v792 = vadd.f32 %v777, %v788
  %v793 = vadd.f32 %v791, %v324
  %v794 = vadd.f32 %v792, %v324
  %v795 = vmax.f32 %v793, 0.0
  %v796 = vmax.f32 %v794, 0.0
  %797 = vmatpush.msra.mxu0 0.0
  %798 = vmatpush.msra.mxu0 0.0
  %799 = vmatpush.msra.mxu0 0.0
  %800 = vmatpush.msra.mxu0 0.0
  %801 = vmatpush.msra.mxu0 0.0
  %802 = vmatpush.msra.mxu0 0.0
  %803 = vmatpush.msra.mxu0 0.0
  %804 = vmatpush.msra.mxu0 0.0
  %805 = vmatpush.msra.mxu0 0.0
  %806 = vmatpush.msra.mxu0 0.0
  %807 = vmatpush.msra.mxu0 0.0
  %808 = vmatpush.msra.mxu0 0.0
  %809 = vmatpush.msra.mxu0 0.0
  %810 = vmatpush.msra.mxu0 0.0
  %811 = vmatpush.msra.mxu0 0.0
  %812 = vmatpush.msra.mxu0 %v795
  %813 = vmatmul.f32.gmra.mxu0 %v332
  %v814 = vpop.f32.mrf.mxu0
  %v815 = vadd.f32 0.0, %v814
  %816 = vmatmul.f32.gmra.mxu0 %v335
  %v817 = vpop.f32.mrf.mxu0
  %v818 = vadd.f32 0.0, %v817
  %819 = vmatmul.f32.gmra.mxu0 %v338
  %v820 = vpop.f32.mrf.mxu0
  %v821 = vadd.f32 0.0, %v820
  %822 = vmatmul.f32.gmra.mxu0 %v341
  %v823 = vpop.f32.mrf.mxu0
  %v824 = vadd.f32 0.0, %v823
  %825 = vmatmul.f32.gmra.mxu0 %v344
  %v826 = vpop.f32.mrf.mxu0
  %v827 = vadd.f32 0.0, %v826
  %828 = vmatmul.f32.gmra.mxu0 %v347
  %v829 = vpop.f32.mrf.mxu0
  %v830 = vadd.f32 0.0, %v829
  %831 = vmatmul.f32.gmra.mxu0 %v350
  %v832 = vpop.f32.mrf.mxu0
  %v833 = vadd.f32 0.0, %v832
  %834 = vmatmul.f32.gmra.mxu0 %v353
  %v835 = vpop.f32.mrf.mxu0
  %v836 = vadd.f32 0.0, %v835
  %837 = vmatmul.f32.gmra.mxu0 %v356
  %v838 = vpop.f32.mrf.mxu0
  %v839 = vadd.f32 0.0, %v838
  %840 = vdwg.mxu0
  %841 = vmatpush.msra.mxu0 0.0
  %842 = vmatpush.msra.mxu0 0.0
  %843 = vmatpush.msra.mxu0 0.0
  %844 = vmatpush.msra.mxu0 0.0
  %845 = vmatpush.msra.mxu0 0.0
  %846 = vmatpush.msra.mxu0 0.0
  %847 = vmatpush.msra.mxu0 0.0
  %848 = vmatpush.msra.mxu0 0.0
  %849 = vmatpush.msra.mxu0 0.0
  %850 = vmatpush.msra.mxu0 0.0
  %851 = vmatpush.msra.mxu0 0.0
  %852 = vmatpush.msra.mxu0 0.0
  %853 = vmatpush.msra.mxu0 0.0
  %854 = vmatpush.msra.mxu0 0.0
  %855 = vmatpush.msra.mxu0 0.0
  %856 = vmatpush.msra.mxu0 %v796
  %857 = vmatmul.f32.gmra.mxu0 %v332
  %v858 = vpop.f32.mrf.mxu0
  %v859 = vadd.f32 0.0, %v858
  %860 = vmatmul.f32.gmra.mxu0 %v335
  %v861 = vpop.f32.mrf.mxu0
  %v862 = vadd.f32 0.0, %v861
  %863 = vmatmul.f32.gmra.mxu0 %v338
  %v864 = vpop.f32.mrf.mxu0
  %v865 = vadd.f32 0.0, %v864
  %866 = vmatmul.f32.gmra.mxu0 %v341
  %v867 = vpop.f32.mrf.mxu0
  %v868 = vadd.f32 0.0, %v867
  %869 = vmatmul.f32.gmra.mxu0 %v344
  %v870 = vpop.f32.mrf.mxu0
  %v871 = vadd.f32 0.0, %v870
  %872 = vmatmul.f32.gmra.mxu0 %v347
  %v873 = vpop.f32.mrf.mxu0
  %v874 = vadd.f32 0.0, %v873
  %875 = vmatmul.f32.gmra.mxu0 %v350
  %v876 = vpop.f32.mrf.mxu0
  %v877 = vadd.f32 0.0, %v876
  %878 = vmatmul.f32.gmra.mxu0 %v353
  %v879 = vpop.f32.mrf.mxu0
  %v880 = vadd.f32 0.0, %v879
  %881 = vmatmul.f32.gmra.mxu0 %v356
  %v882 = vpop.f32.mrf.mxu0
  %v883 = vadd.f32 0.0, %v882
  %884 = vdwg.mxu0
  %v885 = vadd.f32 %v815, 0.0
  %v886 = vadd.f32 %v859, 0.0
  %889 = vrot.lane.b32.xlu0 %v818, 127
  %v890 = vpop.permute.xlu0 %889
  %891 = vrot.lane.b32.xlu0 %v862, 127
  %v892 = vpop.permute.xlu0 %891
  %v893 = vsel %vm219, %v890, %v892
  %v896 = vadd.f32 %v885, %v893
  %v897 = vadd.f32 %v886, %v892
  %900 = vrot.lane.b32.xlu0 %v821, 126
  %v901 = vpop.permute.xlu0 %900
  %902 = vrot.lane.b32.xlu0 %v865, 126
  %v903 = vpop.permute.xlu0 %902
  %v904 = vsel %vm231, %v901, %v903
  %v907 = vadd.f32 %v896, %v904
  %v908 = vadd.f32 %v897, %v903
  %911 = vrot.lane.b32.xlu0 %v824, 112
  %v912 = vpop.permute.xlu0 %911
  %913 = vrot.lane.b32.xlu0 %v868, 112
  %v914 = vpop.permute.xlu0 %913
  %v915 = vsel %vm243, %v912, %v914
  %v918 = vadd.f32 %v907, %v915
  %v919 = vadd.f32 %v908, %v914
  %922 = vrot.lane.b32.xlu0 %v827, 111
  %v923 = vpop.permute.xlu0 %922
  %924 = vrot.lane.b32.xlu0 %v871, 111
  %v925 = vpop.permute.xlu0 %924
  %v926 = vsel %vm255, %v923, %v925
  %v929 = vadd.f32 %v918, %v926
  %v930 = vadd.f32 %v919, %v925
  %933 = vrot.lane.b32.xlu0 %v830, 110
  %v934 = vpop.permute.xlu0 %933
  %935 = vrot.lane.b32.xlu0 %v874, 110
  %v936 = vpop.permute.xlu0 %935
  %v937 = vsel %vm267, %v934, %v936
  %v940 = vadd.f32 %v929, %v937
  %v941 = vadd.f32 %v930, %v936
  %944 = vrot.lane.b32.xlu0 %v833, 96
  %v945 = vpop.permute.xlu0 %944
  %946 = vrot.lane.b32.xlu0 %v877, 96
  %v947 = vpop.permute.xlu0 %946
  %v948 = vsel %vm282, %v945, %v947
  %v951 = vadd.f32 %v940, %v948
  %v952 = vadd.f32 %v941, %v947
  %955 = vrot.lane.b32.xlu0 %v836, 95
  %v956 = vpop.permute.xlu0 %955
  %957 = vrot.lane.b32.xlu0 %v880, 95
  %v958 = vpop.permute.xlu0 %957
  %v959 = vsel %vm298, %v956, %v958
  %v962 = vadd.f32 %v951, %v959
  %v963 = vadd.f32 %v952, %v958
  %966 = vrot.lane.b32.xlu0 %v839, 94
  %v967 = vpop.permute.xlu0 %966
  %968 = vrot.lane.b32.xlu0 %v883, 94
  %v969 = vpop.permute.xlu0 %968
  %v970 = vsel %vm314, %v967, %v969
  %v973 = vadd.f32 %v962, %v970
  %v974 = vadd.f32 %v963, %v969
  %v975 = vadd.f32 %v973, %v539
  %v976 = vadd.f32 %v974, %v539
  %v977 = vmax.f32 %v975, 0.0
  %v978 = vmax.f32 %v976, 0.0
  %s979 = scalar_lea.vmem %s5, 16
  %980 = vst [vmem:[%s979] sm:$0xff] %v977
  %981 = vst.msk [vmem:[%s979 + $0x8] sm:$0xff] %vm546, %v978
  // Predicated region
  $region22: #{double_conv_forward.1} parent=0 // pred_check
    _
  $region23: #{double_conv_forward.1} parent=0 // pred_check_branch
    %983 = sbr.rel (0) target = $region25
  $region24: #{double_conv_forward.1} parent=0 // pred_region
    _
  $region25: #{double_conv_forward.1} parent=0 // pred_fallthru
    _
  // Predicated region
  $region26: #{double_conv_forward.1} parent=0 // pred_check
    _
  $region27: #{double_conv_forward.1} parent=0 // pred_check_branch
    %985 = sbr.rel (0) target = $region29
  $region28: #{double_conv_forward.1} parent=0 // pred_region
    _
  $region29: #{double_conv_forward.1} parent=0 // pred_fallthru
    _

</llo_original>
